<compile_context>
chip_gen: v6e
topology: v6e:2x2x1
jax: 0.10.0
libtpu: 0.0.40
codegen_flags: <defaults>
</compile_context>

<pallas_src>
import jax
import jax.numpy as jnp
from jax.experimental import pallas as pl
from jax.experimental.pallas import tpu as pltpu

NEG_INF = -1.0e9  # matches torch.FloatTensor([-1000000000.0]) in the reference module


def _masked_linear_kernel(x_ref, w_ref, bm_ref, o_ref, acc_ref):
    """Computes one (block_b, block_c) output tile; K (x_dim) is the innermost axis."""
    k = pl.program_id(2)

    @pl.when(k == 0)
    def _():
        acc_ref[...] = jnp.zeros_like(acc_ref)

    # bf16 MXU matmul with f32 accumulation.
    acc_ref[...] += jnp.dot(x_ref[...], w_ref[...],
                            preferred_element_type=jnp.float32)

    @pl.when(k == pl.num_programs(2) - 1)
    def _():
        bm = bm_ref[...]                 # (2, block_c) f32: row 0 = bias, row 1 = mask
        bias = bm[0:1, :]                # (1, block_c), broadcast over rows
        keep = bm[1:2, :] > 0.0          # (1, block_c) bool, broadcast over rows
        pred = acc_ref[...] + bias
        o_ref[...] = jnp.where(keep, pred, NEG_INF).astype(o_ref.dtype)


def _round_up(x, m):
    return ((x + m - 1) // m) * m


def _footprint_bytes(bb, bk, bc):
    # Double-buffered bf16 X/W tiles, f32 (bias,mask) and output tiles, f32 accumulator.
    return (2 * bb * bk * 2          # X  (bf16, 2 buffers)
            + 2 * bk * bc * 2        # W  (bf16, 2 buffers)
            + 2 * 2 * bc * 4         # bias+mask (f32, 2 buffers)
            + 2 * bb * bc * 4        # output (f32, 2 buffers)
            + bb * bc * 4)           # accumulator scratch


def _choose_tiles(B, D, C, budget):
    """Pick (block_b, block_k, block_c).  Priority: keep K untiled (W read once),
    then maximize the lane-dense class tile, then the batch tile."""
    bb_cap = min(_round_up(B, 8), 512)
    c_full = _round_up(C, 128)

    bc_opts = []
    for c in (2048, 1024, 512, 256, 128):
        v = min(c_full, c)
        if v not in bc_opts:
            bc_opts.append(v)

    # K may only be tiled when the tile divides D exactly (padded K tiles would
    # accumulate garbage into the f32 accumulator).
    bk_opts = [D] + [k for k in (2048, 1024, 512, 256, 128) if k < D and D % k == 0]

    bb_opts = []
    v = bb_cap
    while v >= 8:
        if v % 8 == 0:
            bb_opts.append(v)
        v //= 2
    if not bb_opts:
        bb_opts = [8]
    if bb_opts[-1] != 8:
        bb_opts.append(8)

    for bk in bk_opts:            # prefer untiled K: W streamed from HBM exactly once
        for bc in bc_opts:        # then the widest lane-dense class tile
            for bb in bb_opts:    # then the tallest batch tile
                if _footprint_bytes(bb, bk, bc) <= budget:
                    return bb, bk, bc
    return bb_opts[-1], bk_opts[-1], bc_opts[-1]


@jax.jit
def masked_classifier_forward(x, w, b, mask_bool):
    """x: (B, x_dim) f32, w: (x_dim, C) f32 (pre-transposed Linear weight),
    b: (C,) f32, mask_bool: (C,) bool.  Returns (B, C) f32."""
    B, D = x.shape
    C = w.shape[1]

    # Generation-aware VMEM budget (v5e/v6e: 128 MiB, v7x: 64 MiB per TC).
    try:
        vmem_cap = int(pltpu.get_tpu_info().vmem_capacity_bytes)
    except Exception:
        vmem_cap = 64 * 1024 * 1024  # conservative fallback (v7x per-TC VMEM)

    budget = int(0.70 * vmem_cap)
    block_b, block_k, block_c = _choose_tiles(B, D, C, budget)

    # If the parallel grid would be a single program, split the class axis so both
    # v7x TensorCores get work (harmless elsewhere).
    if pl.cdiv(C, block_c) == 1 and pl.cdiv(B, block_b) == 1 and block_c > 128:
        block_c = max(128, (block_c // 2 // 128) * 128)

    n_c_tiles = pl.cdiv(C, block_c)
    n_b_tiles = pl.cdiv(B, block_b)
    n_k_tiles = pl.cdiv(D, block_k)
    grid = (n_c_tiles, n_b_tiles, n_k_tiles)   # class OUTER, batch inner, K innermost

    # bf16 inputs for the MXU; bias+mask packed into one f32 (2, C) operand.
    x_bf16 = x.astype(jnp.bfloat16)
    w_bf16 = w.astype(jnp.bfloat16)
    bm = jnp.stack([b.astype(jnp.float32),
                    mask_bool.astype(jnp.float32)], axis=0)   # (2, C)

    footprint = _footprint_bytes(block_b, block_k, block_c)
    vmem_limit = int(min(int(0.9 * vmem_cap),
                         max(2 * footprint, 16 * 1024 * 1024)))

    # Actual streamed HBM traffic under this grid order:
    #   W read once (re-read per batch tile only if K is tiled), X once per class tile.
    w_reads = n_b_tiles if n_k_tiles > 1 else 1
    cost = pl.CostEstimate(
        flops=2 * B * D * C,
        transcendentals=0,
        bytes_accessed=(D * C * 2 * w_reads
                        + B * D * 2 * n_c_tiles
                        + B * C * 4
                        + 2 * C * 4),
    )

    return pl.pallas_call(
        _masked_linear_kernel,
        out_shape=jax.ShapeDtypeStruct((B, C), jnp.float32),
        grid_spec=pltpu.PrefetchScalarGridSpec(
            num_scalar_prefetch=0,
            grid=grid,
            in_specs=[
                # j = class tile (outer), i = batch tile (inner), k = reduction tile.
                pl.BlockSpec((block_b, block_k), lambda j, i, k: (i, k)),   # X
                pl.BlockSpec((block_k, block_c), lambda j, i, k: (k, j)),   # W (resident
                                                                            #  across i)
                pl.BlockSpec((2, block_c), lambda j, i, k: (0, j)),         # bias+mask
            ],
            out_specs=pl.BlockSpec((block_b, block_c), lambda j, i, k: (i, j)),
            scratch_shapes=[pltpu.VMEM((block_b, block_c), jnp.float32)],
        ),
        compiler_params=pltpu.CompilerParams(
            dimension_semantics=("parallel", "parallel", "arbitrary"),
            vmem_limit_bytes=vmem_limit,
        ),
        cost_estimate=cost,
    )(x_bf16, w_bf16, bm)


if __name__ == "__main__":
    key = jax.random.PRNGKey(0)
    k_x, k_w, k_b, k_m = jax.random.split(key, 4)

    # Small shapes consistent with the module: batch=16, x_dim=32, all_classes_dim=256.
    B, X_DIM, N_CLASSES = 16, 32, 256

    X = jax.random.normal(k_x, (B, X_DIM), dtype=jnp.float32)

    # Deterministic nn.Linear-style init: U(-1/sqrt(in), 1/sqrt(in)).
    bound = 1.0 / (X_DIM ** 0.5)
    W = jax.random.uniform(k_w, (X_DIM, N_CLASSES), dtype=jnp.float32,
                           minval=-bound, maxval=bound)
    bvec = jax.random.uniform(k_b, (N_CLASSES,), dtype=jnp.float32,
                              minval=-bound, maxval=bound)

    # Deterministic boolean class mask (roughly half the classes allowed).
    mask_bool = jax.random.bernoulli(k_m, p=0.5, shape=(N_CLASSES,))

    out = masked_classifier_forward(X, W, bvec, mask_bool)
    out = jax.block_until_ready(out)

    # Reference at the same (bf16 weights/activations, f32 accumulate) precision.
    xb = X.astype(jnp.bfloat16).astype(jnp.float32)
    wb = W.astype(jnp.bfloat16).astype(jnp.float32)
    ref = jnp.where(mask_bool[None, :], xb @ wb + bvec[None, :], NEG_INF)

    assert out.shape == (B, N_CLASSES)
    assert jnp.allclose(out, ref, atol=2e-3, rtol=2e-3), "mismatch vs reference"

    print("KERNEL_OK")
</pallas_src>

<mosaic_0001>
module attributes {stable_mosaic.version = 11 : i64} {
  func.func @_masked_linear_kernel(%arg0: i32, %arg1: i32, %arg2: i32, %arg3: memref<16x32xbf16, #tpu.memory_space<vmem>>, %arg4: memref<32x128xbf16, #tpu.memory_space<vmem>>, %arg5: memref<2x128xf32, #tpu.memory_space<vmem>>, %arg6: memref<16x128xf32, #tpu.memory_space<vmem>>, %arg7: memref<16x128xf32, #tpu.memory_space<vmem>>) attributes {dimension_semantics = [#tpu.dimension_semantics<parallel>, #tpu.dimension_semantics<parallel>, #tpu.dimension_semantics<arbitrary>], iteration_bounds = array<i64: 2, 1, 1>, scalar_prefetch = 0 : i64, scratch_operands = 1 : i64, tpu.core_type = #tpu.core_type<tc>, window_params = [{transform_indices = @transform_0, window_bounds = array<i64: 16, 32>}, {transform_indices = @transform_1, window_bounds = array<i64: 32, 128>}, {transform_indices = @transform_2, window_bounds = array<i64: 2, 128>}, {transform_indices = @transform_3, window_bounds = array<i64: 16, 128>}]} {
    %c0_i32 = arith.constant 0 : i32
    %0 = arith.cmpi eq, %arg2, %c0_i32 : i32
    %1 = arith.extui %0 : i1 to i32
    %c0_i32_0 = arith.constant 0 : i32
    %2 = arith.cmpi ne, %1, %c0_i32_0 : i32
    scf.if %2 {
      %cst_10 = arith.constant 0.000000e+00 : f32
      %12 = vector.broadcast %cst_10 : f32 to vector<16x128xf32>
      %c0_11 = arith.constant 0 : index
      %c0_12 = arith.constant 0 : index
      %13 = vector.load %arg7[%c0_11, %c0_12] : memref<16x128xf32, #tpu.memory_space<vmem>>, vector<16x128xf32>
      tpu.vector_store %arg7[%c0_11, %c0_12], %12 {strides = array<i32>} : memref<16x128xf32, #tpu.memory_space<vmem>>, vector<16x128xf32>,
    } else {
    }
    %c0 = arith.constant 0 : index
    %c0_1 = arith.constant 0 : index
    %3 = vector.load %arg7[%c0, %c0_1] : memref<16x128xf32, #tpu.memory_space<vmem>>, vector<16x128xf32>
    %c0_2 = arith.constant 0 : index
    %c0_3 = arith.constant 0 : index
    %4 = vector.load %arg3[%c0_2, %c0_3] : memref<16x32xbf16, #tpu.memory_space<vmem>>, vector<16x32xbf16>
    %c0_4 = arith.constant 0 : index
    %c0_5 = arith.constant 0 : index
    %5 = vector.load %arg4[%c0_4, %c0_5] : memref<32x128xbf16, #tpu.memory_space<vmem>>, vector<32x128xbf16>
    %cst = arith.constant dense<0.000000e+00> : vector<16x128xf32>
    %6 = tpu.matmul %4, %5, %cst {dimension_numbers = #tpu.dot_dimension_numbers<[1], [0], [0], [1], [0, 0, 1, 1], [], []>} : vector<16x32xbf16>, vector<32x128xbf16>, vector<16x128xf32> -> vector<16x128xf32>
    %7 = arith.addf %3, %6 : vector<16x128xf32>
    %c0_6 = arith.constant 0 : index
    %c0_7 = arith.constant 0 : index
    %8 = vector.load %arg7[%c0_6, %c0_7] : memref<16x128xf32, #tpu.memory_space<vmem>>, vector<16x128xf32>
    tpu.vector_store %arg7[%c0_6, %c0_7], %7 {strides = array<i32>} : memref<16x128xf32, #tpu.memory_space<vmem>>, vector<16x128xf32>,
    %c0_i32_8 = arith.constant 0 : i32
    %9 = arith.cmpi eq, %arg2, %c0_i32_8 : i32
    %10 = arith.extui %9 : i1 to i32
    %c0_i32_9 = arith.constant 0 : i32
    %11 = arith.cmpi ne, %10, %c0_i32_9 : i32
    scf.if %11 {
      %c0_10 = arith.constant 0 : index
      %c0_11 = arith.constant 0 : index
      %12 = vector.load %arg5[%c0_10, %c0_11] : memref<2x128xf32, #tpu.memory_space<vmem>>, vector<2x128xf32>
      %13 = vector.extract_strided_slice %12 {offsets = [0, 0], sizes = [1, 128], strides = [1, 1]} : vector<2x128xf32> to vector<1x128xf32>
      %14 = vector.extract_strided_slice %12 {offsets = [1, 0], sizes = [1, 128], strides = [1, 1]} : vector<2x128xf32> to vector<1x128xf32>
      %cst_12 = arith.constant 0.000000e+00 : f32
      %15 = vector.broadcast %cst_12 : f32 to vector<1x128xf32>
      %16 = arith.cmpf ogt, %14, %15 : vector<1x128xf32>
      %c0_13 = arith.constant 0 : index
      %c0_14 = arith.constant 0 : index
      %17 = vector.load %arg7[%c0_13, %c0_14] : memref<16x128xf32, #tpu.memory_space<vmem>>, vector<16x128xf32>
      %18 = vector.broadcast %13 : vector<1x128xf32> to vector<16x128xf32>
      %19 = arith.addf %17, %18 : vector<16x128xf32>
      %cst_15 = arith.constant -1.000000e+09 : f32
      %20 = vector.shape_cast %16 : vector<1x128xi1> to vector<1x128xi1>
      %21 = vector.broadcast %20 : vector<1x128xi1> to vector<16x128xi1>
      %22 = vector.broadcast %cst_15 : f32 to vector<16x128xf32>
      %23 = arith.select %21, %19, %22 : vector<16x128xi1>, vector<16x128xf32>
      %c0_16 = arith.constant 0 : index
      %c0_17 = arith.constant 0 : index
      %24 = vector.load %arg6[%c0_16, %c0_17] : memref<16x128xf32, #tpu.memory_space<vmem>>, vector<16x128xf32>
      tpu.vector_store %arg6[%c0_16, %c0_17], %23 {strides = array<i32>} : memref<16x128xf32, #tpu.memory_space<vmem>>, vector<16x128xf32>,
    } else {
    }
    return
  }
  func.func @transform_0(%arg0: i32, %arg1: i32, %arg2: i32) -> (i32, i32) {
    %c0_i32 = arith.constant 0 : i32
    return %arg1, %arg2 : i32, i32
  }
  func.func @transform_1(%arg0: i32, %arg1: i32, %arg2: i32) -> (i32, i32) {
    %c0_i32 = arith.constant 0 : i32
    return %arg2, %arg0 : i32, i32
  }
  func.func @transform_2(%arg0: i32, %arg1: i32, %arg2: i32) -> (i32, i32) {
    %c0_i32 = arith.constant 0 : i32
    %c0_i32_0 = arith.constant 0 : i32
    return %c0_i32, %arg0 : i32, i32
  }
  func.func @transform_3(%arg0: i32, %arg1: i32, %arg2: i32) -> (i32, i32) {
    %c0_i32 = arith.constant 0 : i32
    return %arg1, %arg0 : i32, i32
  }
}

</mosaic_0001>

<llo_original>
// kernel: masked_classifier_forward.1
$region0: #{masked_classifier_forward.1}
  #allocation0 [shape = 'u32[]', space=smem, size = 0x4, offset = 0x4, fixed_abs, tag = 'smem constant byte address 0x4 - core index']
  #allocation1 [shape = 'u32[144,128]{1,0:T(1,128)}', space=vmem, size = 0x12000, scoped, tag = 'internal scratch']
  #allocation2 [shape = 'f32[16,128]{1,0:T(8,128)}', space=vmem, size = 0x2000, scoped, tag = 'scratch operand']
  %s0 = inlined_call_operand.vmem [shape: bf16[16,32], index: 0, kind: input, shape index: {}]
  %s1 = inlined_call_operand.vmem [shape: bf16[32,256], index: 1, kind: input, shape index: {}]
  %s2 = inlined_call_operand.vmem [shape: f32[2,256], index: 2, kind: input, shape index: {}]
  %s3 = inlined_call_operand.hbm [shape: f32[16,256], index: 3, kind: output, shape index: {}]
  %s4 = sld [smem:[#allocation0]]
  $region94: #{masked_classifier_forward.1} parent=0
    _
  %s6 = ssub.s32 1, %s4
  %s7 = scalar_select 0, %s6, %s4
  $region1: #{masked_classifier_forward.1} parent=0
    #allocation3 [shape = 'u8[16384]{0}', space=vmem, size = 0x4000, scoped, tag = 'input window, operand 1']
    #allocation4 [shape = 'u8[16384]{0}', space=vmem, size = 0x4000, scoped, tag = 'output window, operand 0']
    #allocation5 [shape = 's32[2]{0}', space=sflag, size = 0x8, scoped, tag = 'scoped memory for masked_classifier_forward.1']
    %8 = vsyncpa [#allocation5], 0
    %s9 = scalar_lea.sflag [#allocation5], 1
    %10 = vsyncpa %s9, 0
    loop: start=0, step=1, limit=4
    $region2: #{masked_classifier_forward.1} parent=1 // loop_pre_header
      _
    $region3: #{masked_classifier_forward.1} parent=1 // loop_header
      %s12 = sphi 0, %s16
      %p13 = scmp.ge.s32.totalorder %s12, 4
      %s19 = sphi 0, %s38
      %s20 = sphi 0, %s34
      %s21 = sphi 0, %s30
      %s22 = sphi 0, %s19
      %s23 = sphi 0, %s20
      %s24 = sphi 0, %s21
      %s25 = sphi 0, %s22
      %s26 = sphi 0, %s23
      %s27 = sphi 0, %s24
      %s43 = sphi 0, %s45
      %s46 = sphi 0, %s43
      %s47 = sphi 0, %s46
      %s63 = sphi 0, %s47
      %s71 = sphi 0, %s73
      %s74 = sphi 0, %s71
      %s75 = sphi 0, %s74
      %s91 = sphi 0, %s75
      %s97 = sphi 0, %s99
      %s100 = sphi 0, %s97
      %s101 = sphi 0, %s100
      %s117 = sphi 0, %s101
      %s125 = sphi 0, %s127
      %s128 = sphi 0, %s125
      %s129 = sphi 0, %s128
      %s145 = sphi 0, %s129
    $region4: #{masked_classifier_forward.1} parent=1 // loop_header_branch
      %15 = sbr.rel (%p13) target = $region8
    $region5: #{masked_classifier_forward.1} parent=1 // loop_body
      %s17 = ssub.s32 %s12, 1
      %s18 = ssub.s32 %s12, 2
      %s28 = sadd.s32 1, %s21
      %p29 = scmp.ge.s32.totalorder %s28, 1
      %s30 = scalar_select %p29, 0, %s28
      %s31 = sadd.s32 1, %s20
      %s32 = scalar_select %p29, %s31, %s20
      %p33 = scmp.ge.s32.totalorder %s32, 1
      %s34 = scalar_select %p33, 0, %s32
      %s35 = sadd.s32 1, %s19
      %s36 = scalar_select %p33, %s35, %s19
      %p37 = scmp.ge.s32.totalorder %s36, 2
      %s38 = scalar_select %p37, 0, %s36
      %s39 = ssub.s32 %s20, %s34
      %s40 = ssub.s32 %s21, %s30
      %s41 = sor.u32 %s39, %s40
      %p42 = scmp.eq.s32.totalorder %s41, 0
      %s44 = sadd.s32 %s43, 1
      %s45 = scalar_select %p42, %s43, %s44
      %p48 = pneg %p42
      %p49 = scmp.eq.s32.totalorder %s12, 1
      %p50 = por %p48, %p49
      %p51 = scmp.ne.s32.totalorder %s43, %s46
      %p52 = scmp.eq.s32.totalorder %s12, 0
      %p53 = por %p51, %p52
      %p54 = scmp.ne.s32.totalorder %s43, %s46
      %p55 = scmp.eq.s32.totalorder %s17, 1
      %p56 = por %p54, %p55
      %p57 = scmp.ne.s32.totalorder %s46, %s47
      %p58 = scmp.eq.s32.totalorder %s17, 0
      %p59 = por %p57, %p58
      %p60 = scmp.ne.s32.totalorder %s46, %s47
      %p61 = scmp.eq.s32.totalorder %s18, 1
      %p62 = por %p60, %p61
      %p64 = scmp.ne.s32.totalorder %s47, %s63
      %p65 = scmp.eq.s32.totalorder %s18, 0
      %p66 = por %p64, %p65
      %s67 = ssub.s32 %s21, %s30
      %s68 = ssub.s32 %s19, %s38
      %s69 = sor.u32 %s67, %s68
      %p70 = scmp.eq.s32.totalorder %s69, 0
      %s72 = sadd.s32 %s71, 1
      %s73 = scalar_select %p70, %s71, %s72
      %p76 = pneg %p70
      %p77 = scmp.eq.s32.totalorder %s12, 1
      %p78 = por %p76, %p77
      %p79 = scmp.ne.s32.totalorder %s71, %s74
      %p80 = scmp.eq.s32.totalorder %s12, 0
      %p81 = por %p79, %p80
      %p82 = scmp.ne.s32.totalorder %s71, %s74
      %p83 = scmp.eq.s32.totalorder %s17, 1
      %p84 = por %p82, %p83
      %p85 = scmp.ne.s32.totalorder %s74, %s75
      %p86 = scmp.eq.s32.totalorder %s17, 0
      %p87 = por %p85, %p86
      %p88 = scmp.ne.s32.totalorder %s74, %s75
      %p89 = scmp.eq.s32.totalorder %s18, 1
      %p90 = por %p88, %p89
      %p92 = scmp.ne.s32.totalorder %s75, %s91
      %p93 = scmp.eq.s32.totalorder %s18, 0
      %p94 = por %p92, %p93
      %s95 = ssub.s32 %s19, %s38
      %p96 = scmp.eq.s32.totalorder %s95, 0
      %s98 = sadd.s32 %s97, 1
      %s99 = scalar_select %p96, %s97, %s98
      %p102 = pneg %p96
      %p103 = scmp.eq.s32.totalorder %s12, 1
      %p104 = por %p102, %p103
      %p105 = scmp.ne.s32.totalorder %s97, %s100
      %p106 = scmp.eq.s32.totalorder %s12, 0
      %p107 = por %p105, %p106
      %p108 = scmp.ne.s32.totalorder %s97, %s100
      %p109 = scmp.eq.s32.totalorder %s17, 1
      %p110 = por %p108, %p109
      %p111 = scmp.ne.s32.totalorder %s100, %s101
      %p112 = scmp.eq.s32.totalorder %s17, 0
      %p113 = por %p111, %p112
      %p114 = scmp.ne.s32.totalorder %s100, %s101
      %p115 = scmp.eq.s32.totalorder %s18, 1
      %p116 = por %p114, %p115
      %p118 = scmp.ne.s32.totalorder %s101, %s117
      %p119 = scmp.eq.s32.totalorder %s18, 0
      %p120 = por %p118, %p119
      %s121 = ssub.s32 %s20, %s34
      %s122 = ssub.s32 %s19, %s38
      %s123 = sor.u32 %s121, %s122
      %p124 = scmp.eq.s32.totalorder %s123, 0
      %s126 = sadd.s32 %s125, 1
      %s127 = scalar_select %p124, %s125, %s126
      %p130 = pneg %p124
      %p131 = scmp.eq.s32.totalorder %s12, 1
      %p132 = por %p130, %p131
      %p133 = scmp.ne.s32.totalorder %s125, %s128
      %p134 = scmp.eq.s32.totalorder %s12, 0
      %p135 = por %p133, %p134
      %p136 = scmp.ne.s32.totalorder %s125, %s128
      %p137 = scmp.eq.s32.totalorder %s17, 1
      %p138 = por %p136, %p137
      %p139 = scmp.ne.s32.totalorder %s128, %s129
      %p140 = scmp.eq.s32.totalorder %s17, 0
      %p141 = por %p139, %p140
      %p142 = scmp.ne.s32.totalorder %s128, %s129
      %p143 = scmp.eq.s32.totalorder %s18, 1
      %p144 = por %p142, %p143
      %p146 = scmp.ne.s32.totalorder %s129, %s145
      %p147 = scmp.eq.s32.totalorder %s18, 0
      %p148 = por %p146, %p147
      %p149 = scmp.le.s32.totalorder 1, %s12
      %p150 = scmp.lt.s32.totalorder %s12, 3
      %p151 = pnand %p149, %p150
      %p152 = pneg %p151
      // Predicated region
      $region9: #{masked_classifier_forward.1} parent=5 // pred_check
        _
      $region10: #{masked_classifier_forward.1} parent=5 // pred_check_branch
        %154 = sbr.rel (%p151) target = $region12
      $region11: #{masked_classifier_forward.1} parent=5 // pred_region
        %s155 = ssub.s32 %s12, 1
        // Predicated region
        $region13: #{masked_classifier_forward.1} parent=11 // pred_check
          %p156 = pneg %p59
        $region14: #{masked_classifier_forward.1} parent=11 // pred_check_branch
          %158 = sbr.rel (%p156) target = $region16
        $region15: #{masked_classifier_forward.1} parent=11 // pred_region
          %s159 = smul.u32 2, %s23
          %p160 = scmp.lt.s32.totalorder %s159, 1
          %s161 = scalar_select %p160, %s159, 1
          %p162 = scmp.lt.s32.totalorder %s24, 0
          %s163 = scalar_select %p162, %s24, 0
          %s164 = sadd.s32 %s163, %s161
          %s165 = smul.addr %s164, 4
          %s166 = scalar_lea.vmem %s0, %s165
          %s167 = smul.u32 2, %s23
        $region16: #{masked_classifier_forward.1} parent=11 // pred_fallthru
          _
      $region12: #{masked_classifier_forward.1} parent=5 // pred_fallthru
        _
      %p168 = scmp.lt.s32.totalorder %s12, 2
      // Predicated region
      $region17: #{masked_classifier_forward.1} parent=5 // pred_check
        %p169 = pneg %p168
      $region18: #{masked_classifier_forward.1} parent=5 // pred_check_branch
        %171 = sbr.rel (%p169) target = $region20
      $region19: #{masked_classifier_forward.1} parent=5 // pred_region
        // Predicated region
        $region21: #{masked_classifier_forward.1} parent=19 // pred_check
          %p172 = pneg %p81
        $region22: #{masked_classifier_forward.1} parent=19 // pred_check_branch
          %174 = sbr.rel (%p172) target = $region24
        $region23: #{masked_classifier_forward.1} parent=19 // pred_region
          %s175 = sand.u32 %s71, 1
          %s176 = sand.u32 %s71, 1
          %s177 = smul.addr %s176, 16
          %s178 = scalar_lea.vmem [#allocation3], %s177
          %s179 = smul.u32 4, %s21
          %s180 = smul.addr %s179, 2
          %s181 = sadd.s32 %s19, %s180
          %s182 = smul.addr %s181, 4
          %s183 = scalar_lea.vmem %s1, %s182
          // Predicated region
          $region25: #{masked_classifier_forward.1} parent=23 // pred_check
            _
          $region26: #{masked_classifier_forward.1} parent=23 // pred_check_branch
            %185 = sbr.rel (0) target = $region28
          $region27: #{masked_classifier_forward.1} parent=23 // pred_region
            // Predicated region
            $region29: #{masked_classifier_forward.1} parent=27 // pred_check
              _
            $region30: #{masked_classifier_forward.1} parent=27 // pred_check_branch
              %187 = sbr.rel target = $region32
            $region31: #{masked_classifier_forward.1} parent=27 // pred_region
              // Predicated region
              $region44: #{masked_classifier_forward.1} parent=31 // pred_check
                _
              $region45: #{masked_classifier_forward.1} parent=31 // pred_check_branch
                %209 = sbr.rel (0) target = $region47
              $region46: #{masked_classifier_forward.1} parent=31 // pred_region
                loop: start=0, step=1, limit=1
                $region48: #{masked_classifier_forward.1} parent=46 // loop_pre_header
                  _
                $region49: #{masked_classifier_forward.1} parent=46 // loop_header
                  %s211 = sphi 0, %s215
                  %p212 = scmp.ge.s32.totalorder %s211, 1
                  %s216 = sphi %s183, %s183
                  %s217 = sphi %s178, %s178
                $region50: #{masked_classifier_forward.1} parent=46 // loop_header_branch
                  %214 = sbr.rel (%p212) target = $region54
                $region51: #{masked_classifier_forward.1} parent=46 // loop_body
                  _
                $region52: #{masked_classifier_forward.1} parent=46 // loop_footer
                  %s215 = sadd.s32 1, %s211
                $region53: #{masked_classifier_forward.1} parent=46 // loop_footer_branch
                  %210 = sbr.rel target = $region49
                $region54: #{masked_classifier_forward.1} parent=46 // loop_exit
                  _
                %s219 = ssub.s32 16, 1
                loop: start=0, step=1, limit=1
                $region55: #{masked_classifier_forward.1} parent=46 // loop_pre_header
                  _
                $region56: #{masked_classifier_forward.1} parent=46 // loop_header
                  %s221 = sphi 0, %s225
                  %p222 = scmp.ge.s32.totalorder %s221, 1
                  %s226 = sphi %s183, %s183
                  %s227 = sphi %s178, %s178
                $region57: #{masked_classifier_forward.1} parent=46 // loop_header_branch
                  %224 = sbr.rel (%p222) target = $region61
                $region58: #{masked_classifier_forward.1} parent=46 // loop_body
                  %v228 = vld [vmem:[%s226] sm:%s219]
                  %229 = vst [vmem:[%s227] sm:%s219] %v228
                  %v230 = vld [vmem:[%s226 + $0x8] sm:%s219]
                  %231 = vst [vmem:[%s227 + $0x4] sm:%s219] %v230
                  %v232 = vld [vmem:[%s226 + $0x10] sm:%s219]
                  %233 = vst [vmem:[%s227 + $0x8] sm:%s219] %v232
                  %v234 = vld [vmem:[%s226 + $0x18] sm:%s219]
                  %235 = vst [vmem:[%s227 + $0xc] sm:%s219] %v234
                $region59: #{masked_classifier_forward.1} parent=46 // loop_footer
                  %s225 = sadd.s32 1, %s221
                $region60: #{masked_classifier_forward.1} parent=46 // loop_footer_branch
                  %220 = sbr.rel target = $region56
                $region61: #{masked_classifier_forward.1} parent=46 // loop_exit
                  _
              $region47: #{masked_classifier_forward.1} parent=31 // pred_fallthru
                _
            $region32: #{masked_classifier_forward.1} parent=27 // pred_fallthru
              _
            // Predicated region
            $region33: #{masked_classifier_forward.1} parent=27 // pred_check
              _
            $region34: #{masked_classifier_forward.1} parent=27 // pred_check_branch
              %189 = sbr.rel (0) target = $region36
            $region35: #{masked_classifier_forward.1} parent=27 // pred_region
              %s191 = ssub.s32 16, 1
              loop: start=0, step=1, limit=1
              $region37: #{masked_classifier_forward.1} parent=35 // loop_pre_header
                _
              $region38: #{masked_classifier_forward.1} parent=35 // loop_header
                %s193 = sphi 0, %s197
                %p194 = scmp.ge.s32.totalorder %s193, 1
                %s198 = sphi %s183, %s183
                %s199 = sphi %s178, %s178
              $region39: #{masked_classifier_forward.1} parent=35 // loop_header_branch
                %196 = sbr.rel (%p194) target = $region43
              $region40: #{masked_classifier_forward.1} parent=35 // loop_body
                %v200 = vld [vmem:[%s198] sm:%s191]
                %201 = vst [vmem:[%s199] sm:%s191] %v200
                %v202 = vld [vmem:[%s198 + $0x8] sm:%s191]
                %203 = vst [vmem:[%s199 + $0x4] sm:%s191] %v202
                %v204 = vld [vmem:[%s198 + $0x10] sm:%s191]
                %205 = vst [vmem:[%s199 + $0x8] sm:%s191] %v204
                %v206 = vld [vmem:[%s198 + $0x18] sm:%s191]
                %207 = vst [vmem:[%s199 + $0xc] sm:%s191] %v206
              $region41: #{masked_classifier_forward.1} parent=35 // loop_footer
                %s197 = sadd.s32 1, %s193
              $region42: #{masked_classifier_forward.1} parent=35 // loop_footer_branch
                %192 = sbr.rel target = $region38
              $region43: #{masked_classifier_forward.1} parent=35 // loop_exit
                _
            $region36: #{masked_classifier_forward.1} parent=27 // pred_fallthru
              _
          $region28: #{masked_classifier_forward.1} parent=23 // pred_fallthru
            _
          %236 = vnop
        $region24: #{masked_classifier_forward.1} parent=19 // pred_fallthru
          _
        // Predicated region
        $region62: #{masked_classifier_forward.1} parent=19 // pred_check
          %p237 = pneg %p107
        $region63: #{masked_classifier_forward.1} parent=19 // pred_check_branch
          %239 = sbr.rel (%p237) target = $region65
        $region64: #{masked_classifier_forward.1} parent=19 // pred_region
          %p240 = scmp.lt.s32.totalorder %s19, 1
          %s241 = scalar_select %p240, %s19, 1
          %s242 = smul.addr %s241, 2
          %s243 = scalar_lea.vmem %s2, %s242
        $region65: #{masked_classifier_forward.1} parent=19 // pred_fallthru
          _
      $region20: #{masked_classifier_forward.1} parent=5 // pred_fallthru
        _
      %p244 = scmp.le.s32.totalorder 1, %s12
      %p245 = scmp.lt.s32.totalorder %s12, 3
      %p246 = pnand %p244, %p245
      %p247 = pneg %p246
      // Predicated region
      $region66: #{masked_classifier_forward.1} parent=5 // pred_check
        _
      $region67: #{masked_classifier_forward.1} parent=5 // pred_check_branch
        %249 = sbr.rel (%p246) target = $region69
      $region68: #{masked_classifier_forward.1} parent=5 // pred_region
        %s250 = ssub.s32 %s12, 1
        %s251 = sand.u32 %s74, 1
        %s252 = sand.u32 %s74, 1
        %s253 = smul.addr %s252, 16
        %s254 = scalar_lea.vmem [#allocation3], %s253
        // Predicated region
        $region70: #{masked_classifier_forward.1} parent=68 // pred_check
          %p255 = pneg %p87
        $region71: #{masked_classifier_forward.1} parent=68 // pred_check_branch
          %257 = sbr.rel (%p255) target = $region73
        $region72: #{masked_classifier_forward.1} parent=68 // pred_region
          _
        $region73: #{masked_classifier_forward.1} parent=68 // pred_fallthru
          _
        %s258 = smul.u32 2, %s23
        %p259 = scmp.lt.s32.totalorder %s258, 1
        %s260 = scalar_select %p259, %s258, 1
        %p261 = scmp.lt.s32.totalorder %s24, 0
        %s262 = scalar_select %p261, %s24, 0
        %s263 = sadd.s32 %s262, %s260
        %s264 = smul.addr %s263, 4
        %s265 = scalar_lea.vmem %s0, %s264
        %p266 = pneg %p59
        %p267 = pneg %p56
        %s268 = sand.u32 %s74, 1
        %s269 = sand.u32 %s74, 1
        %s270 = smul.addr %s269, 16
        %s271 = scalar_lea.vmem [#allocation3], %s270
        %p272 = pneg %p87
        %p273 = pneg %p84
        %p274 = scmp.lt.s32.totalorder %s22, 1
        %s275 = scalar_select %p274, %s22, 1
        %s276 = smul.addr %s275, 2
        %s277 = scalar_lea.vmem %s2, %s276
        %p278 = pneg %p113
        %p279 = pneg %p110
        %p280 = pneg %p141
        %p281 = pneg %p138
        %s282 = sand.u32 %s128, 1
        %s283 = scalar_lea.sflag [#allocation5], %s282
        %s284 = sand.u32 %s128, 1
        %s285 = smul.addr %s284, 16
        %s286 = scalar_lea.vmem [#allocation4], %s285
        %s287 = smul.u32 2, %s23
        %p288 = scmp.lt.s32.totalorder %s287, 1
        %s289 = scalar_select %p288, %s287, 1
        %p290 = scmp.lt.s32.totalorder %s24, 0
        %s291 = scalar_select %p290, %s24, 0
        %s292 = sadd.s32 %s291, %s289
        %s293 = smul.addr %s292, 4
        %s294 = scalar_lea.vmem %s0, %s293
        %s295 = smul.u32 2, %s23
        %s296 = smul.u32 4, %s24
        %p297 = scmp.lt.s32.totalorder %s22, 1
        %s298 = scalar_select %p297, %s22, 1
        %s299 = smul.addr %s298, 2
        %s300 = scalar_lea.vmem %s2, %s299
        %s301 = smul.u32 2, %s23
        %p303 = scmp.eq.s32.totalorder %s24, 0
        // Predicated region
        $region74: #{masked_classifier_forward.1} parent=68 // pred_check
          %p304 = pneg %p303
        $region75: #{masked_classifier_forward.1} parent=68 // pred_check_branch
          %306 = sbr.rel (%p304) target = $region77
        $region76: #{masked_classifier_forward.1} parent=68 // pred_region
          %307 = vst [vmem:[#allocation2] sm:$0xff] 0.0
          %308 = vst [vmem:[#allocation2 + $0x8] sm:$0xff] 0.0
        $region77: #{masked_classifier_forward.1} parent=68 // pred_fallthru
          _
        %v309 = vld [vmem:[#allocation2] sm:$0xff]
        %v310 = vld [vmem:[#allocation2 + $0x8] sm:$0xff]
        %v311 = vld [vmem:[%s294] sm:$0xf]
        %v312 = vld [vmem:[%s294 + $0x4] sm:$0xf]
        %v313 = vld [vmem:[%s254] sm:$0xf]
        %v314 = vld [vmem:[%s254 + $0x4] sm:$0xf]
        %v315 = vld [vmem:[%s254 + $0x8] sm:$0xf]
        %v316 = vld [vmem:[%s254 + $0xc] sm:$0xf]
        %v319 = vunpack.c.l.b16 %v311
        %v320 = vunpack.c.l.b16 %v312
        %v321 = vpack.c.b16 %v320, %v319
        %v326 = vunpack.c.l.b16 %v313
        %v327 = vunpack.c.l.b16 %v314
        %v328 = vunpack.c.l.b16 %v315
        %v329 = vunpack.c.l.b16 %v316
        %v330 = vpack.c.b16 %v327, %v326
        %v331 = vpack.c.b16 %v329, %v328
        %vm334 = vcmask 261120
        %v336 = vsel %vm334, %v321, 0
        %338 = vmatprep.subr.bf16.mxu0 0
        %339 = vmatpush1.bf16.msra.mxu0 0
        %340 = vmatprep.subr.bf16.mxu0 0
        %341 = vmatpush1.bf16.msra.mxu0 0
        %342 = vmatprep.subr.bf16.mxu0 0
        %343 = vmatpush1.bf16.msra.mxu0 0
        %344 = vmatprep.subr.bf16.mxu0 0
        %345 = vmatpush1.bf16.msra.mxu0 0
        %346 = vmatprep.subr.bf16.mxu0 0
        %347 = vmatpush1.bf16.msra.mxu0 0
        %348 = vmatprep.subr.bf16.mxu0 0
        %349 = vmatpush1.bf16.msra.mxu0 0
        %350 = vmatprep.subr.bf16.mxu0 0
        %351 = vmatpush1.bf16.msra.mxu0 %v331
        %352 = vmatprep.subr.bf16.mxu0 0
        %353 = vmatpush1.bf16.msra.mxu0 %v330
        %354 = vmatprep.subr.bf16.mxu0 0
        %355 = vmatpush2.bf16.msra.mxu0 0
        %356 = vmatprep.subr.bf16.mxu0 0
        %357 = vmatpush2.bf16.msra.mxu0 0
        %358 = vmatprep.subr.bf16.mxu0 0
        %359 = vmatpush2.bf16.msra.mxu0 0
        %360 = vmatprep.subr.bf16.mxu0 0
        %361 = vmatpush2.bf16.msra.mxu0 0
        %362 = vmatprep.subr.bf16.mxu0 0
        %363 = vmatpush2.bf16.msra.mxu0 0
        %364 = vmatprep.subr.bf16.mxu0 0
        %365 = vmatpush2.bf16.msra.mxu0 0
        %366 = vmatprep.subr.bf16.mxu0 0
        %367 = vmatpush2.bf16.msra.mxu0 0
        %368 = vmatprep.subr.bf16.mxu0 0
        %369 = vmatpush2.bf16.msra.mxu0 0
        %370 = vmatprep.mubr.bf16.mxu0 0
        %371 = vmatmul.mubr.bf16.gmra.mxu0 %v336
        %v372 = vpop.f32.mrf.mxu0
        %v373 = vadd.f32 0.0, %v372
        %v374 = vpop.f32.mrf.mxu0
        %v375 = vpop.f32.mrf.mxu0
        %v376 = vadd.f32 0.0, %v375
        %v377 = vpop.f32.mrf.mxu0
        %378 = vdwg.mxu0
        %v379 = vadd.f32 %v309, %v373
        %v380 = vadd.f32 %v310, %v376
        %381 = vst [vmem:[#allocation2] sm:$0xff] %v379
        %382 = vst [vmem:[#allocation2 + $0x8] sm:$0xff] %v380
        // Predicated region
        $region78: #{masked_classifier_forward.1} parent=68 // pred_check
          %p383 = pneg %p303
        $region79: #{masked_classifier_forward.1} parent=68 // pred_check_branch
          %385 = sbr.rel (%p383) target = $region81
        $region80: #{masked_classifier_forward.1} parent=68 // pred_region
          %v386 = vld [vmem:[%s300] sm:$0x3]
          %vm387 = vcmp.gt.f32.partialorder %v386, 0.0
          %v388 = vld [vmem:[#allocation2] sm:$0xff]
          %v389 = vld [vmem:[#allocation2 + $0x8] sm:$0xff]
          %v390 = vlaneseq
          %v391 = vshrl.u32 %v390, 7
          %v392 = vsub.s32 0, %v391
          %v393 = vrot.slane %v386, %v392
          %v394 = vadd.f32 %v388, %v393
          %v395 = vadd.f32 %v389, %v393
          %v396 = vsel %vm387, 1, 0
          %v397 = vlaneseq
          %v398 = vshrl.u32 %v397, 7
          %v399 = vsub.s32 1, %v398
          %v400 = vrot.slane %v396, %v399
          %vm401 = vcmp.eq.s32.totalorder %v400, 1
          %v402 = vsel %vm401, %v394, -1e+09
          %v403 = vsel %vm401, %v395, -1e+09
          %404 = vst [vmem:[%s286] sm:$0xff] %v402
          %405 = vst [vmem:[%s286 + $0x8] sm:$0xff] %v403
        $region81: #{masked_classifier_forward.1} parent=68 // pred_fallthru
          _
        %s406 = sand.u32 %s128, 1
        %s407 = scalar_lea.sflag [#allocation5], %s406
        %s408 = sand.u32 %s128, 1
        %s409 = smul.addr %s408, 16
        %s410 = scalar_lea.vmem [#allocation4], %s409
        // Predicated region
        $region82: #{masked_classifier_forward.1} parent=68 // pred_check
          %p411 = pneg %p138
        $region83: #{masked_classifier_forward.1} parent=68 // pred_check_branch
          %413 = sbr.rel (%p411) target = $region85
        $region84: #{masked_classifier_forward.1} parent=68 // pred_region
          %s414 = smul.u32 2, %s23
          %s416 = ssub.s32 256, 256
          %417 = vsyncadd %s407, %s416
          %s418 = smul.addr %s414, 2
          %s419 = sadd.s32 %s22, %s418
          %s420 = smul.addr %s419, 128
          %s421 = scalar_lea.hbm %s3, %s420
          %s422 = sshll.u32 %s410, 4
          %s423 = int_to_ptr.vmem [resolvable:$true] %s422
          %428 = dma.vmem_to_hbm [thread:$0]  %s423, 256, %s421, %s407, 128, 256, 8
        $region85: #{masked_classifier_forward.1} parent=68 // pred_fallthru
          _
      $region69: #{masked_classifier_forward.1} parent=5 // pred_fallthru
        _
      %p429 = scmp.le.s32.totalorder 2, %s12
      // Predicated region
      $region86: #{masked_classifier_forward.1} parent=5 // pred_check
        %p430 = pneg %p429
      $region87: #{masked_classifier_forward.1} parent=5 // pred_check_branch
        %432 = sbr.rel (%p430) target = $region89
      $region88: #{masked_classifier_forward.1} parent=5 // pred_region
        %s433 = ssub.s32 %s12, 2
        // Predicated region
        $region90: #{masked_classifier_forward.1} parent=88 // pred_check
          %p434 = pneg %p144
        $region91: #{masked_classifier_forward.1} parent=88 // pred_check_branch
          %436 = sbr.rel (%p434) target = $region93
        $region92: #{masked_classifier_forward.1} parent=88 // pred_region
          %s437 = sand.u32 %s129, 1
          %s438 = scalar_lea.sflag [#allocation5], %s437
          %s439 = sand.u32 %s129, 1
          %s440 = smul.addr %s439, 16
          %s441 = scalar_lea.vmem [#allocation4], %s440
          %442 = dma.done %s438, 256
        $region93: #{masked_classifier_forward.1} parent=88 // pred_fallthru
          _
      $region89: #{masked_classifier_forward.1} parent=5 // pred_fallthru
        _
    $region6: #{masked_classifier_forward.1} parent=1 // loop_footer
      %s16 = sadd.s32 1, %s12
    $region7: #{masked_classifier_forward.1} parent=1 // loop_footer_branch
      %11 = sbr.rel target = $region3
    $region8: #{masked_classifier_forward.1} parent=1 // loop_exit
      _
    %443 = vsyncpa [#allocation5], 1
    %s444 = scalar_lea.sflag [#allocation5], 1
    %445 = vsyncpa %s444, 1

</llo_original>
